<compile_context>
chip_gen: v7x
topology: tpu7x:2x2x1
jax: 0.10.0
libtpu: 0.0.40
codegen_flags: <defaults>
</compile_context>

<pallas_src>
import functools
import math

import jax
import jax.numpy as jnp
from jax.experimental import pallas as pl
from jax.experimental.pallas import tpu as pltpu


_LANE = 128
_SUBLANE = 8


def _round_up(x, m):
    return ((x + m - 1) // m) * m


def _pad2d(a, rows, cols):
    r, c = a.shape
    return jnp.pad(a, ((0, rows - r), (0, cols - c)))


# ---------------------------------------------------------------------------
# Fused kernel (factory over the static layer count / compute dtype)
# ---------------------------------------------------------------------------
def _make_fused_kernel(n_hidden, compute_dtype):
    """n_hidden x (Linear -> BN -> PReLU) stages followed by a final Linear.

    Ref order: x, (w, scale, shift) * n_hidden, w_last, b_last, [alpha], out
    """

    def kernel(*refs):
        x_ref = refs[0]
        o_ref = refs[-1]
        p = refs[1:-1]
        if n_hidden > 0:
            alpha_ref = p[-1]          # SMEM scalar (PReLU alpha)
            p = p[:-1]

        # Cast the input tile to the MXU compute dtype in-kernel.
        h = x_ref[...].astype(compute_dtype)
        idx = 0
        for _ in range(n_hidden):
            w_ref, s_ref, sh_ref = p[idx], p[idx + 1], p[idx + 2]
            idx += 3
            # Linear (bias folded into BN shift) -> f32 accumulation on MXU.
            y = jnp.dot(h, w_ref[...], preferred_element_type=jnp.float32)
            # BatchNorm1d (eval mode, running stats folded into scale/shift).
            y = y * s_ref[...] + sh_ref[...]
            # PReLU with a single shared alpha (scalar read from SMEM).
            alpha = alpha_ref[0]
            y = jnp.where(y >= 0.0, y, alpha * y)
            # Dropout (eval mode) == identity.
            h = y.astype(compute_dtype)

        # Final Linear (bias added, no activation); store in output dtype.
        w_ref, b_ref = p[idx], p[idx + 1]
        y = jnp.dot(h, w_ref[...], preferred_element_type=jnp.float32)
        o_ref[...] = (y + b_ref[...]).astype(o_ref.dtype)

    return kernel


# ---------------------------------------------------------------------------
# Parameter construction (deterministic, mirrors reset_parameters())
# ---------------------------------------------------------------------------
def init_feedforward_params(key, in_feats, hidden, out_feats, n_layers,
                            dtype=jnp.bfloat16):
    """Returns (static config, tuple of kernel-ready, pre-padded arrays)."""
    gain = math.sqrt(2.0)  # nn.init.calculate_gain('relu')
    if n_layers == 1:
        dims = [(in_feats, out_feats)]
    else:
        dims = ([(in_feats, hidden)]
                + [(hidden, hidden)] * (n_layers - 2)
                + [(hidden, out_feats)])

    eps = 1e-5
    args = []
    shapes = []                     # (stored fan_in, padded fan_out) per layer
    prev_out_pad = in_feats         # first weight keeps fan_in unpadded
    for layer_id, (fan_in, fan_out) in enumerate(dims):
        key, sub = jax.random.split(key)
        bound = gain * math.sqrt(6.0 / (fan_in + fan_out))    # xavier_uniform_
        w = jax.random.uniform(sub, (fan_in, fan_out), jnp.float32,
                               minval=-bound, maxval=bound)
        b = jnp.zeros((fan_out,), jnp.float32)                # zeros_

        fi_s = prev_out_pad
        fo_p = _round_up(fan_out, _LANE)
        shapes.append((fi_s, fo_p))
        prev_out_pad = fo_p
        w_p = _pad2d(w, fi_s, fo_p).astype(dtype)              # bf16 weights

        if layer_id < n_layers - 1:
            # BatchNorm1d defaults right after init: gamma=1, beta=0,
            # running_mean=0, running_var=1  ->  fold into scale/shift and
            # fold the Linear bias into the shift as well (kept in f32).
            scale = jnp.ones((fan_out,), jnp.float32) / jnp.sqrt(1.0 + eps)
            shift = jnp.zeros((fan_out,), jnp.float32) + b * scale
            args += [w_p,
                     _pad2d(scale[None, :], 1, fo_p),
                     _pad2d(shift[None, :], 1, fo_p)]
        else:
            args += [w_p, _pad2d(b[None, :], 1, fo_p)]

    if n_layers > 1:
        args.append(jnp.full((1,), 0.25, jnp.float32))         # PReLU alpha

    config = dict(n_layers=n_layers, in_feats=in_feats, out_feats=out_feats,
                  shapes=tuple(shapes), dtype=dtype)
    return config, tuple(args)


# ---------------------------------------------------------------------------
# Full forward pass (single fused pallas_call)
# ---------------------------------------------------------------------------
def feedforward_net_forward(config, args, x, *, tm_max=1024):
    n_layers = config["n_layers"]
    shapes = config["shapes"]
    cdtype = config["dtype"]
    m, f = x.shape
    assert f == config["in_feats"], (f, config["in_feats"])

    nout_pad = shapes[-1][1]
    w_item = jnp.dtype(cdtype).itemsize
    x_item = jnp.dtype(x.dtype).itemsize

    # --- generation-aware VMEM budget (consistent with vmem_limit_bytes) ----
    try:
        vmem_cap = int(pltpu.get_tpu_info().vmem_capacity_bytes)
    except Exception:
        vmem_cap = 64 * 1024 * 1024            # conservative (v7x per-TC)
    vmem_limit = min(int(vmem_cap * 0.8), vmem_cap - (16 << 20))
    vmem_limit = max(vmem_limit, 32 << 20)
    budget = vmem_limit - (6 << 20)            # headroom for Mosaic scratch

    # --- VMEM accounting -----------------------------------------------------
    # Resident (single-buffered, grid-invariant) operands:
    fixed = 0
    for layer_id, (ki, no) in enumerate(shapes):
        n_aux = 2 if layer_id < n_layers - 1 else 1
        fixed += w_item * ki * no + 4 * n_aux * no
    # Per-row: double-buffered x / out tiles + f32 intermediates per layer.
    per_row = 2 * x_item * f + 2 * x_item * nout_pad + 4 * f
    for (_, no) in shapes:
        per_row += 4 * no

    avail = max(budget - fixed, 0)
    tm_fit = max(_SUBLANE, (avail // per_row) // _SUBLANE * _SUBLANE)
    tm_cap = max(_SUBLANE, min(tm_max, tm_fit))

    # Balance the row tile so the last tile is nearly full, and guarantee at
    # least 2 grid steps (when m permits) so both v7x TensorCores get work.
    n_tiles = max(pl.cdiv(m, tm_cap), 2 if m >= 2 * _SUBLANE else 1)
    tm = max(_SUBLANE, min(tm_cap, _round_up(pl.cdiv(m, n_tiles), _SUBLANE)))
    m_pad = _round_up(m, tm)

    # --- pad rows only when needed; features stay unpadded (full-extent K) --
    xp = x if m_pad == m else jnp.pad(x, ((0, m_pad - m), (0, 0)))

    # --- block specs ---------------------------------------------------------
    resident = pl.Buffered(1)                  # no double-buffer for constants
    in_specs = [pl.BlockSpec((tm, f), lambda i: (i, 0))]
    for layer_id, (ki, no) in enumerate(shapes):
        in_specs.append(pl.BlockSpec((ki, no), lambda i: (0, 0),
                                     pipeline_mode=resident))      # weight
        in_specs.append(pl.BlockSpec((1, no), lambda i: (0, 0),
                                     pipeline_mode=resident))      # scale/bias
        if layer_id < n_layers - 1:
            in_specs.append(pl.BlockSpec((1, no), lambda i: (0, 0),
                                         pipeline_mode=resident))  # shift
    if n_layers > 1:
        in_specs.append(pl.BlockSpec(memory_space=pltpu.MemorySpace.SMEM))
    out_specs = pl.BlockSpec((tm, nout_pad), lambda i: (i, 0))

    # --- cost estimate (scheduling hint) -------------------------------------
    flops = 0
    bytes_accessed = m_pad * f * x_item + m_pad * nout_pad * x_item
    for (ki, no) in shapes:
        flops += 2 * m_pad * ki * no
        bytes_accessed += ki * no * w_item + 3 * no * 4

    out = pl.pallas_call(
        _make_fused_kernel(n_layers - 1, cdtype),
        out_shape=jax.ShapeDtypeStruct((m_pad, nout_pad), x.dtype),
        grid_spec=pltpu.PrefetchScalarGridSpec(
            num_scalar_prefetch=0,
            grid=(m_pad // tm,),
            in_specs=in_specs,
            out_specs=out_specs,
        ),
        compiler_params=pltpu.CompilerParams(
            dimension_semantics=("parallel",),
            vmem_limit_bytes=vmem_limit,
        ),
        cost_estimate=pl.CostEstimate(
            flops=int(flops),
            transcendentals=0,
            bytes_accessed=int(bytes_accessed),
        ),
    )(xp, *args)

    out_feats = config["out_feats"]
    if m_pad != m or nout_pad != out_feats:
        out = out[:m, :out_feats]
    return out


# ---------------------------------------------------------------------------
# Demo
# ---------------------------------------------------------------------------
if __name__ == "__main__":
    key = jax.random.PRNGKey(0)

    num_nodes = 64
    in_feats = 32
    hidden = 32
    out_feats = 16
    n_layers = 3
    dropout = 0.5  # eval mode -> identity

    key, pkey, xkey = jax.random.split(key, 3)
    config, args = init_feedforward_params(pkey, in_feats, hidden, out_feats,
                                           n_layers)
    x = jax.random.normal(xkey, (num_nodes, in_feats), jnp.float32)

    fwd = jax.jit(functools.partial(feedforward_net_forward, config))
    out = jax.block_until_ready(fwd(args, x))
    assert out.shape == (num_nodes, out_feats), out.shape
    assert out.dtype == x.dtype, out.dtype

    print("KERNEL_OK")
</pallas_src>

<mosaic_0001>
module attributes {stable_mosaic.version = 11 : i64} {
  func.func @kernel(%arg0: i32, %arg1: memref<32x32xf32, #tpu.memory_space<vmem>>, %arg2: memref<32x128xbf16, #tpu.memory_space<vmem>>, %arg3: memref<1x128xf32, #tpu.memory_space<vmem>>, %arg4: memref<1x128xf32, #tpu.memory_space<vmem>>, %arg5: memref<128x128xbf16, #tpu.memory_space<vmem>>, %arg6: memref<1x128xf32, #tpu.memory_space<vmem>>, %arg7: memref<1x128xf32, #tpu.memory_space<vmem>>, %arg8: memref<128x128xbf16, #tpu.memory_space<vmem>>, %arg9: memref<1x128xf32, #tpu.memory_space<vmem>>, %arg10: memref<1xf32, #tpu.memory_space<smem>>, %arg11: memref<32x128xf32, #tpu.memory_space<vmem>>) attributes {dimension_semantics = [#tpu.dimension_semantics<parallel>], iteration_bounds = array<i64: 2>, scalar_prefetch = 0 : i64, scratch_operands = 0 : i64, tpu.core_type = #tpu.core_type<tc>, window_params = [{transform_indices = @transform_0, window_bounds = array<i64: 32, 32>}, {pipeline_mode = #tpu.pipeline_mode<synchronous>, transform_indices = @transform_1, window_bounds = array<i64: 32, 128>}, {pipeline_mode = #tpu.pipeline_mode<synchronous>, transform_indices = @transform_2, window_bounds = array<i64: 1, 128>}, {pipeline_mode = #tpu.pipeline_mode<synchronous>, transform_indices = @transform_3, window_bounds = array<i64: 1, 128>}, {pipeline_mode = #tpu.pipeline_mode<synchronous>, transform_indices = @transform_4, window_bounds = array<i64: 128, 128>}, {pipeline_mode = #tpu.pipeline_mode<synchronous>, transform_indices = @transform_5, window_bounds = array<i64: 1, 128>}, {pipeline_mode = #tpu.pipeline_mode<synchronous>, transform_indices = @transform_6, window_bounds = array<i64: 1, 128>}, {pipeline_mode = #tpu.pipeline_mode<synchronous>, transform_indices = @transform_7, window_bounds = array<i64: 128, 128>}, {pipeline_mode = #tpu.pipeline_mode<synchronous>, transform_indices = @transform_8, window_bounds = array<i64: 1, 128>}, {transform_indices = @transform_9, window_bounds = array<i64: 1>}, {transform_indices = @transform_10, window_bounds = array<i64: 32, 128>}]} {
    %c0 = arith.constant 0 : index
    %c0_0 = arith.constant 0 : index
    %0 = vector.load %arg1[%c0, %c0_0] : memref<32x32xf32, #tpu.memory_space<vmem>>, vector<32x32xf32>
    %1 = arith.truncf %0 : vector<32x32xf32> to vector<32x32xbf16>
    %c0_1 = arith.constant 0 : index
    %c0_2 = arith.constant 0 : index
    %2 = vector.load %arg2[%c0_1, %c0_2] : memref<32x128xbf16, #tpu.memory_space<vmem>>, vector<32x128xbf16>
    %cst = arith.constant dense<0.000000e+00> : vector<32x128xf32>
    %3 = tpu.matmul %1, %2, %cst {dimension_numbers = #tpu.dot_dimension_numbers<[1], [0], [0], [1], [0, 0, 1, 1], [], []>} : vector<32x32xbf16>, vector<32x128xbf16>, vector<32x128xf32> -> vector<32x128xf32>
    %c0_3 = arith.constant 0 : index
    %c0_4 = arith.constant 0 : index
    %4 = vector.load %arg3[%c0_3, %c0_4] : memref<1x128xf32, #tpu.memory_space<vmem>>, vector<1x128xf32>
    %5 = vector.broadcast %4 : vector<1x128xf32> to vector<32x128xf32>
    %6 = arith.mulf %3, %5 : vector<32x128xf32>
    %c0_5 = arith.constant 0 : index
    %c0_6 = arith.constant 0 : index
    %7 = vector.load %arg4[%c0_5, %c0_6] : memref<1x128xf32, #tpu.memory_space<vmem>>, vector<1x128xf32>
    %8 = vector.broadcast %7 : vector<1x128xf32> to vector<32x128xf32>
    %9 = arith.addf %6, %8 : vector<32x128xf32>
    %c0_7 = arith.constant 0 : index
    %10 = memref.load %arg10[%c0_7] : memref<1xf32, #tpu.memory_space<smem>>
    %cst_8 = arith.constant 0.000000e+00 : f32
    %11 = vector.broadcast %cst_8 : f32 to vector<32x128xf32>
    %12 = arith.cmpf oge, %9, %11 : vector<32x128xf32>
    %13 = vector.broadcast %10 : f32 to vector<32x128xf32>
    %14 = arith.mulf %13, %9 : vector<32x128xf32>
    %15 = arith.select %12, %9, %14 : vector<32x128xi1>, vector<32x128xf32>
    %16 = arith.truncf %15 : vector<32x128xf32> to vector<32x128xbf16>
    %c0_9 = arith.constant 0 : index
    %c0_10 = arith.constant 0 : index
    %17 = vector.load %arg5[%c0_9, %c0_10] : memref<128x128xbf16, #tpu.memory_space<vmem>>, vector<128x128xbf16>
    %cst_11 = arith.constant dense<0.000000e+00> : vector<32x128xf32>
    %18 = tpu.matmul %16, %17, %cst_11 {dimension_numbers = #tpu.dot_dimension_numbers<[1], [0], [0], [1], [0, 0, 1, 1], [], []>} : vector<32x128xbf16>, vector<128x128xbf16>, vector<32x128xf32> -> vector<32x128xf32>
    %c0_12 = arith.constant 0 : index
    %c0_13 = arith.constant 0 : index
    %19 = vector.load %arg6[%c0_12, %c0_13] : memref<1x128xf32, #tpu.memory_space<vmem>>, vector<1x128xf32>
    %20 = vector.broadcast %19 : vector<1x128xf32> to vector<32x128xf32>
    %21 = arith.mulf %18, %20 : vector<32x128xf32>
    %c0_14 = arith.constant 0 : index
    %c0_15 = arith.constant 0 : index
    %22 = vector.load %arg7[%c0_14, %c0_15] : memref<1x128xf32, #tpu.memory_space<vmem>>, vector<1x128xf32>
    %23 = vector.broadcast %22 : vector<1x128xf32> to vector<32x128xf32>
    %24 = arith.addf %21, %23 : vector<32x128xf32>
    %c0_16 = arith.constant 0 : index
    %25 = memref.load %arg10[%c0_16] : memref<1xf32, #tpu.memory_space<smem>>
    %cst_17 = arith.constant 0.000000e+00 : f32
    %26 = vector.broadcast %cst_17 : f32 to vector<32x128xf32>
    %27 = arith.cmpf oge, %24, %26 : vector<32x128xf32>
    %28 = vector.broadcast %25 : f32 to vector<32x128xf32>
    %29 = arith.mulf %28, %24 : vector<32x128xf32>
    %30 = arith.select %27, %24, %29 : vector<32x128xi1>, vector<32x128xf32>
    %31 = arith.truncf %30 : vector<32x128xf32> to vector<32x128xbf16>
    %c0_18 = arith.constant 0 : index
    %c0_19 = arith.constant 0 : index
    %32 = vector.load %arg8[%c0_18, %c0_19] : memref<128x128xbf16, #tpu.memory_space<vmem>>, vector<128x128xbf16>
    %cst_20 = arith.constant dense<0.000000e+00> : vector<32x128xf32>
    %33 = tpu.matmul %31, %32, %cst_20 {dimension_numbers = #tpu.dot_dimension_numbers<[1], [0], [0], [1], [0, 0, 1, 1], [], []>} : vector<32x128xbf16>, vector<128x128xbf16>, vector<32x128xf32> -> vector<32x128xf32>
    %c0_21 = arith.constant 0 : index
    %c0_22 = arith.constant 0 : index
    %34 = vector.load %arg9[%c0_21, %c0_22] : memref<1x128xf32, #tpu.memory_space<vmem>>, vector<1x128xf32>
    %35 = vector.broadcast %34 : vector<1x128xf32> to vector<32x128xf32>
    %36 = arith.addf %33, %35 : vector<32x128xf32>
    %c0_23 = arith.constant 0 : index
    %c0_24 = arith.constant 0 : index
    %37 = vector.load %arg11[%c0_23, %c0_24] : memref<32x128xf32, #tpu.memory_space<vmem>>, vector<32x128xf32>
    tpu.vector_store %arg11[%c0_23, %c0_24], %36 {strides = array<i32>} : memref<32x128xf32, #tpu.memory_space<vmem>>, vector<32x128xf32>,
    return
  }
  func.func @transform_0(%arg0: i32) -> (i32, i32) {
    %c0_i32 = arith.constant 0 : i32
    %c0_i32_0 = arith.constant 0 : i32
    return %arg0, %c0_i32 : i32, i32
  }
  func.func @transform_1(%arg0: i32) -> (i32, i32) {
    %c0_i32 = arith.constant 0 : i32
    %c0_i32_0 = arith.constant 0 : i32
    %c0_i32_1 = arith.constant 0 : i32
    return %c0_i32, %c0_i32_0 : i32, i32
  }
  func.func @transform_2(%arg0: i32) -> (i32, i32) {
    %c0_i32 = arith.constant 0 : i32
    %c0_i32_0 = arith.constant 0 : i32
    %c0_i32_1 = arith.constant 0 : i32
    return %c0_i32, %c0_i32_0 : i32, i32
  }
  func.func @transform_3(%arg0: i32) -> (i32, i32) {
    %c0_i32 = arith.constant 0 : i32
    %c0_i32_0 = arith.constant 0 : i32
    %c0_i32_1 = arith.constant 0 : i32
    return %c0_i32, %c0_i32_0 : i32, i32
  }
  func.func @transform_4(%arg0: i32) -> (i32, i32) {
    %c0_i32 = arith.constant 0 : i32
    %c0_i32_0 = arith.constant 0 : i32
    %c0_i32_1 = arith.constant 0 : i32
    return %c0_i32, %c0_i32_0 : i32, i32
  }
  func.func @transform_5(%arg0: i32) -> (i32, i32) {
    %c0_i32 = arith.constant 0 : i32
    %c0_i32_0 = arith.constant 0 : i32
    %c0_i32_1 = arith.constant 0 : i32
    return %c0_i32, %c0_i32_0 : i32, i32
  }
  func.func @transform_6(%arg0: i32) -> (i32, i32) {
    %c0_i32 = arith.constant 0 : i32
    %c0_i32_0 = arith.constant 0 : i32
    %c0_i32_1 = arith.constant 0 : i32
    return %c0_i32, %c0_i32_0 : i32, i32
  }
  func.func @transform_7(%arg0: i32) -> (i32, i32) {
    %c0_i32 = arith.constant 0 : i32
    %c0_i32_0 = arith.constant 0 : i32
    %c0_i32_1 = arith.constant 0 : i32
    return %c0_i32, %c0_i32_0 : i32, i32
  }
  func.func @transform_8(%arg0: i32) -> (i32, i32) {
    %c0_i32 = arith.constant 0 : i32
    %c0_i32_0 = arith.constant 0 : i32
    %c0_i32_1 = arith.constant 0 : i32
    return %c0_i32, %c0_i32_0 : i32, i32
  }
  func.func @transform_9(%arg0: i32) -> i32 {
    %c0_i32 = arith.constant 0 : i32
    %c0_i32_0 = arith.constant 0 : i32
    return %c0_i32 : i32
  }
  func.func @transform_10(%arg0: i32) -> (i32, i32) {
    %c0_i32 = arith.constant 0 : i32
    %c0_i32_0 = arith.constant 0 : i32
    return %arg0, %c0_i32 : i32, i32
  }
}

</mosaic_0001>

<llo_original>
// kernel: feedforward_net_forward.1
$region0: #{feedforward_net_forward.1}
  #allocation0 [shape = 'u32[]', space=smem, size = 0x4, offset = 0x4, fixed_abs, tag = 'smem constant byte address 0x4 - core index']
  #allocation1 [shape = 'u32[144,128]{1,0:T(1,128)}', space=vmem, size = 0x12000, scoped, tag = 'internal scratch']
  #allocation2 [shape = 'f32[1]{0:T(128)S(6)}', space=smem, size = 0x200, scoped, tag = 'scoped memory for feedforward_net_forward.1']
  %s0 = inlined_call_operand.vmem [shape: f32[64,32], index: 0, kind: input, shape index: {}]
  %s1 = inlined_call_operand.vmem [shape: bf16[32,128], index: 1, kind: input, shape index: {}]
  %s2 = inlined_call_operand.vmem [shape: f32[1,128], index: 2, kind: input, shape index: {}]
  %s3 = inlined_call_operand.vmem [shape: f32[1,128], index: 3, kind: input, shape index: {}]
  %s4 = inlined_call_operand.vmem [shape: bf16[128,128], index: 4, kind: input, shape index: {}]
  %s5 = inlined_call_operand.vmem [shape: f32[1,128], index: 5, kind: input, shape index: {}]
  %s6 = inlined_call_operand.vmem [shape: f32[1,128], index: 6, kind: input, shape index: {}]
  %s7 = inlined_call_operand.hbm [shape: bf16[128,128], index: 7, kind: input, shape index: {}]
  %s8 = inlined_call_operand.vmem [shape: f32[1,128], index: 8, kind: input, shape index: {}]
  %s9 = inlined_call_operand.<no memory space> [shape: f32[1], index: 9, kind: input, shape index: {}]
  %s10 = inlined_call_operand.vmem [shape: f32[64,128], index: 10, kind: output, shape index: {}]
  %s11 = sld [smem:[#allocation0]]
  $region77: #{feedforward_net_forward.1} parent=0
    _
  %s13 = ssub.s32 1, %s11
  %s14 = scalar_select 0, %s13, %s11
  %15 = sst [smem:[#allocation2]] %s9
  $region1: #{feedforward_net_forward.1} parent=0
    #allocation3 [shape = 'u8[32768]{0}', space=vmem, size = 0x8000, scoped, tag = 'input window, operand 7, single buffered']
    #allocation4 [shape = 's32[2]{0}', space=sflag, size = 0x8, scoped, tag = 'scoped memory for feedforward_net_forward.1']
    %16 = vsyncpa [#allocation4], 0
    loop: start=0, step=1, limit=4
    $region2: #{feedforward_net_forward.1} parent=1 // loop_pre_header
      _
    $region3: #{feedforward_net_forward.1} parent=1 // loop_header
      %s18 = sphi 0, %s22
      %p19 = scmp.ge.s32.totalorder %s18, 4
      %s28 = sphi 0, %s30
      %s31 = sphi 0, %s28
      %s32 = sphi 0, %s31
      %s48 = sphi 0, %s32
      %s52 = sphi 0, %s52
      %s54 = sphi 0, %s52
      %s55 = sphi 0, %s54
      %s69 = sphi 0, %s55
      %s73 = sphi 0, %s73
      %s75 = sphi 0, %s73
      %s76 = sphi 0, %s75
      %s90 = sphi 0, %s76
      %s94 = sphi 0, %s94
      %s96 = sphi 0, %s94
      %s97 = sphi 0, %s96
      %s111 = sphi 0, %s97
      %s115 = sphi 0, %s115
      %s117 = sphi 0, %s115
      %s118 = sphi 0, %s117
      %s132 = sphi 0, %s118
      %s136 = sphi 0, %s136
      %s138 = sphi 0, %s136
      %s139 = sphi 0, %s138
      %s153 = sphi 0, %s139
      %s157 = sphi 0, %s157
      %s159 = sphi 0, %s157
      %s160 = sphi 0, %s159
      %s174 = sphi 0, %s160
      %s178 = sphi 0, %s178
      %s180 = sphi 0, %s178
      %s181 = sphi 0, %s180
      %s195 = sphi 0, %s181
      %s199 = sphi 0, %s199
      %s201 = sphi 0, %s199
      %s202 = sphi 0, %s201
      %s216 = sphi 0, %s202
      %s220 = sphi 0, %s220
      %s222 = sphi 0, %s220
      %s223 = sphi 0, %s222
      %s237 = sphi 0, %s223
      %s243 = sphi 0, %s245
      %s246 = sphi 0, %s243
      %s247 = sphi 0, %s246
      %s263 = sphi 0, %s247
    $region4: #{feedforward_net_forward.1} parent=1 // loop_header_branch
      %21 = sbr.rel (%p19) target = $region8
    $region5: #{feedforward_net_forward.1} parent=1 // loop_body
      %s23 = ssub.s32 %s18, 1
      %s24 = ssub.s32 %s18, 2
      %s25 = sadd.s32 %s18, 1
      %s26 = ssub.s32 %s18, %s25
      %p27 = scmp.eq.s32.totalorder %s26, 0
      %s29 = sadd.s32 %s28, 1
      %s30 = scalar_select %p27, %s28, %s29
      %p33 = pneg %p27
      %p34 = scmp.eq.s32.totalorder %s18, 1
      %p35 = por %p33, %p34
      %p36 = scmp.ne.s32.totalorder %s28, %s31
      %p37 = scmp.eq.s32.totalorder %s18, 0
      %p38 = por %p36, %p37
      %p39 = scmp.ne.s32.totalorder %s28, %s31
      %p40 = scmp.eq.s32.totalorder %s23, 1
      %p41 = por %p39, %p40
      %p42 = scmp.ne.s32.totalorder %s31, %s32
      %p43 = scmp.eq.s32.totalorder %s23, 0
      %p44 = por %p42, %p43
      %p45 = scmp.ne.s32.totalorder %s31, %s32
      %p46 = scmp.eq.s32.totalorder %s24, 1
      %p47 = por %p45, %p46
      %p49 = scmp.ne.s32.totalorder %s32, %s48
      %p50 = scmp.eq.s32.totalorder %s24, 0
      %p51 = por %p49, %p50
      %s53 = sadd.s32 %s52, 1
      %p56 = scmp.eq.s32.totalorder %s18, 1
      %p57 = scmp.ne.s32.totalorder %s52, %s54
      %p58 = scmp.eq.s32.totalorder %s18, 0
      %p59 = por %p57, %p58
      %p60 = scmp.ne.s32.totalorder %s52, %s54
      %p61 = scmp.eq.s32.totalorder %s23, 1
      %p62 = por %p60, %p61
      %p63 = scmp.ne.s32.totalorder %s54, %s55
      %p64 = scmp.eq.s32.totalorder %s23, 0
      %p65 = por %p63, %p64
      %p66 = scmp.ne.s32.totalorder %s54, %s55
      %p67 = scmp.eq.s32.totalorder %s24, 1
      %p68 = por %p66, %p67
      %p70 = scmp.ne.s32.totalorder %s55, %s69
      %p71 = scmp.eq.s32.totalorder %s24, 0
      %p72 = por %p70, %p71
      %s74 = sadd.s32 %s73, 1
      %p77 = scmp.eq.s32.totalorder %s18, 1
      %p78 = scmp.ne.s32.totalorder %s73, %s75
      %p79 = scmp.eq.s32.totalorder %s18, 0
      %p80 = por %p78, %p79
      %p81 = scmp.ne.s32.totalorder %s73, %s75
      %p82 = scmp.eq.s32.totalorder %s23, 1
      %p83 = por %p81, %p82
      %p84 = scmp.ne.s32.totalorder %s75, %s76
      %p85 = scmp.eq.s32.totalorder %s23, 0
      %p86 = por %p84, %p85
      %p87 = scmp.ne.s32.totalorder %s75, %s76
      %p88 = scmp.eq.s32.totalorder %s24, 1
      %p89 = por %p87, %p88
      %p91 = scmp.ne.s32.totalorder %s76, %s90
      %p92 = scmp.eq.s32.totalorder %s24, 0
      %p93 = por %p91, %p92
      %s95 = sadd.s32 %s94, 1
      %p98 = scmp.eq.s32.totalorder %s18, 1
      %p99 = scmp.ne.s32.totalorder %s94, %s96
      %p100 = scmp.eq.s32.totalorder %s18, 0
      %p101 = por %p99, %p100
      %p102 = scmp.ne.s32.totalorder %s94, %s96
      %p103 = scmp.eq.s32.totalorder %s23, 1
      %p104 = por %p102, %p103
      %p105 = scmp.ne.s32.totalorder %s96, %s97
      %p106 = scmp.eq.s32.totalorder %s23, 0
      %p107 = por %p105, %p106
      %p108 = scmp.ne.s32.totalorder %s96, %s97
      %p109 = scmp.eq.s32.totalorder %s24, 1
      %p110 = por %p108, %p109
      %p112 = scmp.ne.s32.totalorder %s97, %s111
      %p113 = scmp.eq.s32.totalorder %s24, 0
      %p114 = por %p112, %p113
      %s116 = sadd.s32 %s115, 1
      %p119 = scmp.eq.s32.totalorder %s18, 1
      %p120 = scmp.ne.s32.totalorder %s115, %s117
      %p121 = scmp.eq.s32.totalorder %s18, 0
      %p122 = por %p120, %p121
      %p123 = scmp.ne.s32.totalorder %s115, %s117
      %p124 = scmp.eq.s32.totalorder %s23, 1
      %p125 = por %p123, %p124
      %p126 = scmp.ne.s32.totalorder %s117, %s118
      %p127 = scmp.eq.s32.totalorder %s23, 0
      %p128 = por %p126, %p127
      %p129 = scmp.ne.s32.totalorder %s117, %s118
      %p130 = scmp.eq.s32.totalorder %s24, 1
      %p131 = por %p129, %p130
      %p133 = scmp.ne.s32.totalorder %s118, %s132
      %p134 = scmp.eq.s32.totalorder %s24, 0
      %p135 = por %p133, %p134
      %s137 = sadd.s32 %s136, 1
      %p140 = scmp.eq.s32.totalorder %s18, 1
      %p141 = scmp.ne.s32.totalorder %s136, %s138
      %p142 = scmp.eq.s32.totalorder %s18, 0
      %p143 = por %p141, %p142
      %p144 = scmp.ne.s32.totalorder %s136, %s138
      %p145 = scmp.eq.s32.totalorder %s23, 1
      %p146 = por %p144, %p145
      %p147 = scmp.ne.s32.totalorder %s138, %s139
      %p148 = scmp.eq.s32.totalorder %s23, 0
      %p149 = por %p147, %p148
      %p150 = scmp.ne.s32.totalorder %s138, %s139
      %p151 = scmp.eq.s32.totalorder %s24, 1
      %p152 = por %p150, %p151
      %p154 = scmp.ne.s32.totalorder %s139, %s153
      %p155 = scmp.eq.s32.totalorder %s24, 0
      %p156 = por %p154, %p155
      %s158 = sadd.s32 %s157, 1
      %p161 = scmp.eq.s32.totalorder %s18, 1
      %p162 = scmp.ne.s32.totalorder %s157, %s159
      %p163 = scmp.eq.s32.totalorder %s18, 0
      %p164 = por %p162, %p163
      %p165 = scmp.ne.s32.totalorder %s157, %s159
      %p166 = scmp.eq.s32.totalorder %s23, 1
      %p167 = por %p165, %p166
      %p168 = scmp.ne.s32.totalorder %s159, %s160
      %p169 = scmp.eq.s32.totalorder %s23, 0
      %p170 = por %p168, %p169
      %p171 = scmp.ne.s32.totalorder %s159, %s160
      %p172 = scmp.eq.s32.totalorder %s24, 1
      %p173 = por %p171, %p172
      %p175 = scmp.ne.s32.totalorder %s160, %s174
      %p176 = scmp.eq.s32.totalorder %s24, 0
      %p177 = por %p175, %p176
      %s179 = sadd.s32 %s178, 1
      %p182 = scmp.eq.s32.totalorder %s18, 1
      %p183 = scmp.ne.s32.totalorder %s178, %s180
      %p184 = scmp.eq.s32.totalorder %s18, 0
      %p185 = por %p183, %p184
      %p186 = scmp.ne.s32.totalorder %s178, %s180
      %p187 = scmp.eq.s32.totalorder %s23, 1
      %p188 = por %p186, %p187
      %p189 = scmp.ne.s32.totalorder %s180, %s181
      %p190 = scmp.eq.s32.totalorder %s23, 0
      %p191 = por %p189, %p190
      %p192 = scmp.ne.s32.totalorder %s180, %s181
      %p193 = scmp.eq.s32.totalorder %s24, 1
      %p194 = por %p192, %p193
      %p196 = scmp.ne.s32.totalorder %s181, %s195
      %p197 = scmp.eq.s32.totalorder %s24, 0
      %p198 = por %p196, %p197
      %s200 = sadd.s32 %s199, 1
      %p203 = scmp.eq.s32.totalorder %s18, 1
      %p204 = scmp.ne.s32.totalorder %s199, %s201
      %p205 = scmp.eq.s32.totalorder %s18, 0
      %p206 = por %p204, %p205
      %p207 = scmp.ne.s32.totalorder %s199, %s201
      %p208 = scmp.eq.s32.totalorder %s23, 1
      %p209 = por %p207, %p208
      %p210 = scmp.ne.s32.totalorder %s201, %s202
      %p211 = scmp.eq.s32.totalorder %s23, 0
      %p212 = por %p210, %p211
      %p213 = scmp.ne.s32.totalorder %s201, %s202
      %p214 = scmp.eq.s32.totalorder %s24, 1
      %p215 = por %p213, %p214
      %p217 = scmp.ne.s32.totalorder %s202, %s216
      %p218 = scmp.eq.s32.totalorder %s24, 0
      %p219 = por %p217, %p218
      %s221 = sadd.s32 %s220, 1
      %p224 = scmp.eq.s32.totalorder %s18, 1
      %p225 = scmp.ne.s32.totalorder %s220, %s222
      %p226 = scmp.eq.s32.totalorder %s18, 0
      %p227 = por %p225, %p226
      %p228 = scmp.ne.s32.totalorder %s220, %s222
      %p229 = scmp.eq.s32.totalorder %s23, 1
      %p230 = por %p228, %p229
      %p231 = scmp.ne.s32.totalorder %s222, %s223
      %p232 = scmp.eq.s32.totalorder %s23, 0
      %p233 = por %p231, %p232
      %p234 = scmp.ne.s32.totalorder %s222, %s223
      %p235 = scmp.eq.s32.totalorder %s24, 1
      %p236 = por %p234, %p235
      %p238 = scmp.ne.s32.totalorder %s223, %s237
      %p239 = scmp.eq.s32.totalorder %s24, 0
      %p240 = por %p238, %p239
      %s241 = ssub.s32 %s18, %s25
      %p242 = scmp.eq.s32.totalorder %s241, 0
      %s244 = sadd.s32 %s243, 1
      %s245 = scalar_select %p242, %s243, %s244
      %p248 = pneg %p242
      %p249 = scmp.eq.s32.totalorder %s18, 1
      %p250 = por %p248, %p249
      %p251 = scmp.ne.s32.totalorder %s243, %s246
      %p252 = scmp.eq.s32.totalorder %s18, 0
      %p253 = por %p251, %p252
      %p254 = scmp.ne.s32.totalorder %s243, %s246
      %p255 = scmp.eq.s32.totalorder %s23, 1
      %p256 = por %p254, %p255
      %p257 = scmp.ne.s32.totalorder %s246, %s247
      %p258 = scmp.eq.s32.totalorder %s23, 0
      %p259 = por %p257, %p258
      %p260 = scmp.ne.s32.totalorder %s246, %s247
      %p261 = scmp.eq.s32.totalorder %s24, 1
      %p262 = por %p260, %p261
      %p264 = scmp.ne.s32.totalorder %s247, %s263
      %p265 = scmp.eq.s32.totalorder %s24, 0
      %p266 = por %p264, %p265
      %p267 = scmp.le.s32.totalorder 1, %s18
      %p268 = scmp.lt.s32.totalorder %s18, 3
      %p269 = pnand %p267, %p268
      %p270 = pneg %p269
      // Predicated region
      $region9: #{feedforward_net_forward.1} parent=5 // pred_check
        _
      $region10: #{feedforward_net_forward.1} parent=5 // pred_check_branch
        %272 = sbr.rel (%p269) target = $region12
      $region11: #{feedforward_net_forward.1} parent=5 // pred_region
        %s273 = ssub.s32 %s18, 1
        // Predicated region
        $region13: #{feedforward_net_forward.1} parent=11 // pred_check
          %p274 = pneg %p65
        $region14: #{feedforward_net_forward.1} parent=11 // pred_check_branch
          %276 = sbr.rel (%p274) target = $region16
        $region15: #{feedforward_net_forward.1} parent=11 // pred_region
          _
        $region16: #{feedforward_net_forward.1} parent=11 // pred_fallthru
          _
        // Predicated region
        $region17: #{feedforward_net_forward.1} parent=11 // pred_check
          %p277 = pneg %p86
        $region18: #{feedforward_net_forward.1} parent=11 // pred_check_branch
          %279 = sbr.rel (%p277) target = $region20
        $region19: #{feedforward_net_forward.1} parent=11 // pred_region
          _
        $region20: #{feedforward_net_forward.1} parent=11 // pred_fallthru
          _
        // Predicated region
        $region21: #{feedforward_net_forward.1} parent=11 // pred_check
          %p280 = pneg %p107
        $region22: #{feedforward_net_forward.1} parent=11 // pred_check_branch
          %282 = sbr.rel (%p280) target = $region24
        $region23: #{feedforward_net_forward.1} parent=11 // pred_region
          _
        $region24: #{feedforward_net_forward.1} parent=11 // pred_fallthru
          _
        // Predicated region
        $region25: #{feedforward_net_forward.1} parent=11 // pred_check
          %p283 = pneg %p128
        $region26: #{feedforward_net_forward.1} parent=11 // pred_check_branch
          %285 = sbr.rel (%p283) target = $region28
        $region27: #{feedforward_net_forward.1} parent=11 // pred_region
          _
        $region28: #{feedforward_net_forward.1} parent=11 // pred_fallthru
          _
        // Predicated region
        $region29: #{feedforward_net_forward.1} parent=11 // pred_check
          %p286 = pneg %p149
        $region30: #{feedforward_net_forward.1} parent=11 // pred_check_branch
          %288 = sbr.rel (%p286) target = $region32
        $region31: #{feedforward_net_forward.1} parent=11 // pred_region
          _
        $region32: #{feedforward_net_forward.1} parent=11 // pred_fallthru
          _
        // Predicated region
        $region33: #{feedforward_net_forward.1} parent=11 // pred_check
          %p289 = pneg %p170
        $region34: #{feedforward_net_forward.1} parent=11 // pred_check_branch
          %291 = sbr.rel (%p289) target = $region36
        $region35: #{feedforward_net_forward.1} parent=11 // pred_region
          _
        $region36: #{feedforward_net_forward.1} parent=11 // pred_fallthru
          _
        // Predicated region
        $region37: #{feedforward_net_forward.1} parent=11 // pred_check
          %p292 = pneg %p191
        $region38: #{feedforward_net_forward.1} parent=11 // pred_check_branch
          %294 = sbr.rel (%p292) target = $region40
        $region39: #{feedforward_net_forward.1} parent=11 // pred_region
          %s296 = ssub.s32 1024, 1024
          %297 = vsyncadd [#allocation4], %s296
          %s298 = sshll.u32 [#allocation3], 4
          %s299 = int_to_ptr.vmem [resolvable:$true] %s298
          %304 = dma.hbm_to_vmem [thread:$0]  %s7, 1024, %s299, [#allocation4], 64, 64, 4
        $region40: #{feedforward_net_forward.1} parent=11 // pred_fallthru
          _
        // Predicated region
        $region41: #{feedforward_net_forward.1} parent=11 // pred_check
          %p305 = pneg %p212
        $region42: #{feedforward_net_forward.1} parent=11 // pred_check_branch
          %307 = sbr.rel (%p305) target = $region44
        $region43: #{feedforward_net_forward.1} parent=11 // pred_region
          _
        $region44: #{feedforward_net_forward.1} parent=11 // pred_fallthru
          _
        // Predicated region
        $region45: #{feedforward_net_forward.1} parent=11 // pred_check
          %p308 = pneg %p233
        $region46: #{feedforward_net_forward.1} parent=11 // pred_check_branch
          %310 = sbr.rel (%p308) target = $region48
        $region47: #{feedforward_net_forward.1} parent=11 // pred_region
          _
        $region48: #{feedforward_net_forward.1} parent=11 // pred_fallthru
          _
      $region12: #{feedforward_net_forward.1} parent=5 // pred_fallthru
        _
      %p311 = scmp.lt.s32.totalorder %s18, 2
      // Predicated region
      $region49: #{feedforward_net_forward.1} parent=5 // pred_check
        %p312 = pneg %p311
      $region50: #{feedforward_net_forward.1} parent=5 // pred_check_branch
        %314 = sbr.rel (%p312) target = $region52
      $region51: #{feedforward_net_forward.1} parent=5 // pred_region
        // Predicated region
        $region53: #{feedforward_net_forward.1} parent=51 // pred_check
          %p315 = pneg %p38
        $region54: #{feedforward_net_forward.1} parent=51 // pred_check_branch
          %317 = sbr.rel (%p315) target = $region56
        $region55: #{feedforward_net_forward.1} parent=51 // pred_region
          %s318 = smul.u32 4, %s18
          %p319 = scmp.lt.s32.totalorder %s318, 7
          %s320 = scalar_select %p319, %s318, 7
          %s321 = smul.addr %s320, 8
          %s322 = scalar_lea.vmem %s0, %s321
          %s323 = smul.u32 4, %s18
        $region56: #{feedforward_net_forward.1} parent=51 // pred_fallthru
          _
      $region52: #{feedforward_net_forward.1} parent=5 // pred_fallthru
        _
      %p324 = scmp.le.s32.totalorder 1, %s18
      %p325 = scmp.lt.s32.totalorder %s18, 3
      %p326 = pnand %p324, %p325
      %p327 = pneg %p326
      // Predicated region
      $region57: #{feedforward_net_forward.1} parent=5 // pred_check
        _
      $region58: #{feedforward_net_forward.1} parent=5 // pred_check_branch
        %329 = sbr.rel (%p326) target = $region60
      $region59: #{feedforward_net_forward.1} parent=5 // pred_region
        %s330 = ssub.s32 %s18, 1
        // Predicated region
        $region61: #{feedforward_net_forward.1} parent=59 // pred_check
          %p331 = pneg %p191
        $region62: #{feedforward_net_forward.1} parent=59 // pred_check_branch
          %333 = sbr.rel (%p331) target = $region64
        $region63: #{feedforward_net_forward.1} parent=59 // pred_region
          %334 = dma.done [#allocation4], 1024
        $region64: #{feedforward_net_forward.1} parent=59 // pred_fallthru
          _
        %s335 = smul.u32 4, %s23
        %p336 = scmp.lt.s32.totalorder %s335, 7
        %s337 = scalar_select %p336, %s335, 7
        %s338 = smul.addr %s337, 8
        %s339 = scalar_lea.vmem %s0, %s338
        %p340 = pneg %p44
        %p341 = pneg %p41
        %p342 = pneg %p65
        %p343 = pneg %p62
        %p344 = pneg %p86
        %p345 = pneg %p83
        %p346 = pneg %p107
        %p347 = pneg %p104
        %p348 = pneg %p128
        %p349 = pneg %p125
        %p350 = pneg %p149
        %p351 = pneg %p146
        %p352 = pneg %p170
        %p353 = pneg %p167
        %p354 = pneg %p191
        %p355 = pneg %p188
        %p356 = pneg %p212
        %p357 = pneg %p209
        %p358 = pneg %p233
        %p359 = pneg %p230
        %p360 = pneg %p259
        %p361 = pneg %p256
        %s362 = smul.u32 4, %s23
        %p363 = scmp.lt.s32.totalorder %s362, 7
        %s364 = scalar_select %p363, %s362, 7
        %s365 = smul.addr %s364, 8
        %s366 = scalar_lea.vmem %s10, %s365
        %s367 = smul.u32 4, %s23
        %p368 = scmp.lt.s32.totalorder %s367, 7
        %s369 = scalar_select %p368, %s367, 7
        %s370 = smul.addr %s369, 8
        %s371 = scalar_lea.vmem %s0, %s370
        %s372 = smul.u32 4, %s23
        %s373 = smul.u32 4, %s23
        %p374 = scmp.lt.s32.totalorder %s373, 7
        %s375 = scalar_select %p374, %s373, 7
        %s376 = smul.addr %s375, 8
        %s377 = scalar_lea.vmem %s10, %s376
        %s378 = smul.u32 4, %s23
        %v380 = vld [vmem:[%s371] sm:$0xff]
        %v381 = vld [vmem:[%s371 + $0x8] sm:$0xff]
        %v382 = vld [vmem:[%s371 + $0x10] sm:$0xff]
        %v383 = vld [vmem:[%s371 + $0x18] sm:$0xff]
        %v384 = vpack.c.bf16 %v381, %v380
        %v385 = vpack.c.bf16 %v383, %v382
        %v386 = vld [vmem:[%s1] sm:$0xf]
        %v387 = vld [vmem:[%s1 + $0x4] sm:$0xf]
        %v388 = vld [vmem:[%s1 + $0x8] sm:$0xf]
        %v389 = vld [vmem:[%s1 + $0xc] sm:$0xf]
        %v394 = vunpack.c.l.b16 %v386
        %v395 = vunpack.c.l.b16 %v387
        %v396 = vunpack.c.l.b16 %v388
        %v397 = vunpack.c.l.b16 %v389
        %v398 = vpack.c.b16 %v395, %v394
        %v399 = vpack.c.b16 %v397, %v396
        %vm402 = vcmask 261120
        %v404 = vsel %vm402, %v384, 0
        %v407 = vsel %vm402, %v385, 0
        %409 = vmatprep.subr.bf16.mxu0 0
        %410 = vmatpush1.bf16.msra.mxu0 %v398
        %411 = vmatprep.subr.bf16.mxu0 0
        %412 = vmatpush1.bf16.msra.mxu0 %v399
        %413 = vmatprep.subr.bf16.mxu0 0
        %414 = vmatpush1.bf16.msra.mxu0 0
        %415 = vmatprep.subr.bf16.mxu0 0
        %416 = vmatpush1.bf16.msra.mxu0 0
        %417 = vmatprep.subr.bf16.mxu0 0
        %418 = vmatpush1.bf16.msra.mxu0 0
        %419 = vmatprep.subr.bf16.mxu0 0
        %420 = vmatpush1.bf16.msra.mxu0 0
        %421 = vmatprep.subr.bf16.mxu0 0
        %422 = vmatpush1.bf16.msra.mxu0 0
        %423 = vmatprep.subr.bf16.mxu0 0
        %424 = vmatpush1.bf16.msra.mxu0 0
        %425 = vmatprep.subr.bf16.mxu0 0
        %426 = vmatpush1.bf16.msra.mxu0 0
        %427 = vmatprep.subr.bf16.mxu0 0
        %428 = vmatpush1.bf16.msra.mxu0 0
        %429 = vmatprep.subr.bf16.mxu0 0
        %430 = vmatpush1.bf16.msra.mxu0 0
        %431 = vmatprep.subr.bf16.mxu0 0
        %432 = vmatpush1.bf16.msra.mxu0 0
        %433 = vmatprep.subr.bf16.mxu0 0
        %434 = vmatpush1.bf16.msra.mxu0 0
        %435 = vmatprep.subr.bf16.mxu0 0
        %436 = vmatpush1.bf16.msra.mxu0 0
        %437 = vmatprep.subr.bf16.mxu0 0
        %438 = vmatpush1.bf16.msra.mxu0 0
        %439 = vmatprep.subr.bf16.mxu0 0
        %440 = vmatpush1.bf16.msra.mxu0 0
        %441 = vmatprep.mubr.bf16.mxu0 0
        %442 = vmatmul.mubr.bf16.gmra.mrb[0].mxu0 %v404
        %v443 = vpop.f32.mrb[0].mxu0
        %v444 = vadd.f32 0.0, %v443
        %v445 = vpop.f32.mrb[0].mxu0
        %v446 = vpop.f32.mrb[0].mxu0
        %v447 = vadd.f32 0.0, %v446
        %v448 = vpop.f32.mrb[0].mxu0
        %449 = vmatprep.mubr.bf16.mxu0 0
        %450 = vmatmul.mubr.bf16.gmra.mrb[0].mxu0 %v407
        %v451 = vpop.f32.mrb[0].mxu0
        %v452 = vadd.f32 0.0, %v451
        %v453 = vpop.f32.mrb[0].mxu0
        %v454 = vpop.f32.mrb[0].mxu0
        %v455 = vadd.f32 0.0, %v454
        %v456 = vpop.f32.mrb[0].mxu0
        %457 = vdwg.mxu0
        %v458 = vld [vmem:[%s2] sm:$0x1]
        %v460 = vlaneseq
        %v461 = vshrl.u32 %v460, 7
        %v462 = vsub.s32 0, %v461
        %v463 = vrot.slane %v458, %v462
        %v465 = vmul.f32 %v444, %v463
        %v466 = vmul.f32 %v447, %v463
        %v467 = vmul.f32 %v452, %v463
        %v468 = vmul.f32 %v455, %v463
        %v469 = vld [vmem:[%s3] sm:$0x1]
        %v471 = vlaneseq
        %v472 = vshrl.u32 %v471, 7
        %v473 = vsub.s32 0, %v472
        %v474 = vrot.slane %v469, %v473
        %v476 = vadd.f32 %v465, %v474
        %v477 = vadd.f32 %v466, %v474
        %v478 = vadd.f32 %v467, %v474
        %v479 = vadd.f32 %v468, %v474
        %s480 = sld [smem:[#allocation2]]
        %vm481 = vcmp.ge.f32.partialorder %v476, 0.0
        %vm482 = vcmp.ge.f32.partialorder %v477, 0.0
        %vm483 = vcmp.ge.f32.partialorder %v478, 0.0
        %vm484 = vcmp.ge.f32.partialorder %v479, 0.0
        %v485 = vstv %s480
        %v486 = vmul.f32 %v485, %v476
        %v487 = vmul.f32 %v485, %v477
        %v488 = vmul.f32 %v485, %v478
        %v489 = vmul.f32 %v485, %v479
        %v490 = vsel %vm481, %v476, %v486
        %v491 = vsel %vm482, %v477, %v487
        %v492 = vsel %vm483, %v478, %v488
        %v493 = vsel %vm484, %v479, %v489
        %v494 = vpack.c.bf16 %v491, %v490
        %v495 = vpack.c.bf16 %v493, %v492
        %v496 = vld [vmem:[%s4] sm:$0xf]
        %v497 = vld [vmem:[%s4 + $0x4] sm:$0xf]
        %v498 = vld [vmem:[%s4 + $0x8] sm:$0xf]
        %v499 = vld [vmem:[%s4 + $0xc] sm:$0xf]
        %v500 = vld [vmem:[%s4 + $0x10] sm:$0xf]
        %v501 = vld [vmem:[%s4 + $0x14] sm:$0xf]
        %v502 = vld [vmem:[%s4 + $0x18] sm:$0xf]
        %v503 = vld [vmem:[%s4 + $0x1c] sm:$0xf]
        %v504 = vld [vmem:[%s4 + $0x20] sm:$0xf]
        %v505 = vld [vmem:[%s4 + $0x24] sm:$0xf]
        %v506 = vld [vmem:[%s4 + $0x28] sm:$0xf]
        %v507 = vld [vmem:[%s4 + $0x2c] sm:$0xf]
        %v508 = vld [vmem:[%s4 + $0x30] sm:$0xf]
        %v509 = vld [vmem:[%s4 + $0x34] sm:$0xf]
        %v510 = vld [vmem:[%s4 + $0x38] sm:$0xf]
        %v511 = vld [vmem:[%s4 + $0x3c] sm:$0xf]
        %v528 = vunpack.c.l.b16 %v496
        %v529 = vunpack.c.l.b16 %v497
        %v530 = vunpack.c.l.b16 %v498
        %v531 = vunpack.c.l.b16 %v499
        %v532 = vunpack.c.l.b16 %v500
        %v533 = vunpack.c.l.b16 %v501
        %v534 = vunpack.c.l.b16 %v502
        %v535 = vunpack.c.l.b16 %v503
        %v536 = vunpack.c.l.b16 %v504
        %v537 = vunpack.c.l.b16 %v505
        %v538 = vunpack.c.l.b16 %v506
        %v539 = vunpack.c.l.b16 %v507
        %v540 = vunpack.c.l.b16 %v508
        %v541 = vunpack.c.l.b16 %v509
        %v542 = vunpack.c.l.b16 %v510
        %v543 = vunpack.c.l.b16 %v511
        %v544 = vpack.c.b16 %v529, %v528
        %v545 = vpack.c.b16 %v531, %v530
        %v546 = vpack.c.b16 %v533, %v532
        %v547 = vpack.c.b16 %v535, %v534
        %v548 = vpack.c.b16 %v537, %v536
        %v549 = vpack.c.b16 %v539, %v538
        %v550 = vpack.c.b16 %v541, %v540
        %v551 = vpack.c.b16 %v543, %v542
        %560 = vmatprep.subr.bf16.mxu0 0
        %561 = vmatpush1.bf16.msra.mxu0 %v544
        %562 = vmatprep.subr.bf16.mxu0 0
        %563 = vmatpush1.bf16.msra.mxu0 %v545
        %564 = vmatprep.subr.bf16.mxu0 0
        %565 = vmatpush1.bf16.msra.mxu0 %v546
        %566 = vmatprep.subr.bf16.mxu0 0
        %567 = vmatpush1.bf16.msra.mxu0 %v547
        %568 = vmatprep.subr.bf16.mxu0 0
        %569 = vmatpush1.bf16.msra.mxu0 %v548
        %570 = vmatprep.subr.bf16.mxu0 0
        %571 = vmatpush1.bf16.msra.mxu0 %v549
        %572 = vmatprep.subr.bf16.mxu0 0
        %573 = vmatpush1.bf16.msra.mxu0 %v550
        %574 = vmatprep.subr.bf16.mxu0 0
        %575 = vmatpush1.bf16.msra.mxu0 %v551
        %576 = vmatprep.subr.bf16.mxu0 0
        %577 = vmatpush1.bf16.msra.mxu0 0
        %578 = vmatprep.subr.bf16.mxu0 0
        %579 = vmatpush1.bf16.msra.mxu0 0
        %580 = vmatprep.subr.bf16.mxu0 0
        %581 = vmatpush1.bf16.msra.mxu0 0
        %582 = vmatprep.subr.bf16.mxu0 0
        %583 = vmatpush1.bf16.msra.mxu0 0
        %584 = vmatprep.subr.bf16.mxu0 0
        %585 = vmatpush1.bf16.msra.mxu0 0
        %586 = vmatprep.subr.bf16.mxu0 0
        %587 = vmatpush1.bf16.msra.mxu0 0
        %588 = vmatprep.subr.bf16.mxu0 0
        %589 = vmatpush1.bf16.msra.mxu0 0
        %590 = vmatprep.subr.bf16.mxu0 0
        %591 = vmatpush1.bf16.msra.mxu0 0
        %592 = vmatprep.mubr.bf16.mxu0 0
        %593 = vmatmul.mubr.bf16.gmra.mrb[0].mxu0 %v494
        %v594 = vpop.f32.mrb[0].mxu0
        %v595 = vadd.f32 0.0, %v594
        %v596 = vpop.f32.mrb[0].mxu0
        %v597 = vpop.f32.mrb[0].mxu0
        %v598 = vadd.f32 0.0, %v597
        %v599 = vpop.f32.mrb[0].mxu0
        %600 = vmatprep.mubr.bf16.mxu0 0
        %601 = vmatmul.mubr.bf16.gmra.mrb[0].mxu0 %v495
        %v602 = vpop.f32.mrb[0].mxu0
        %v603 = vadd.f32 0.0, %v602
        %v604 = vpop.f32.mrb[0].mxu0
        %v605 = vpop.f32.mrb[0].mxu0
        %v606 = vadd.f32 0.0, %v605
        %v607 = vpop.f32.mrb[0].mxu0
        %608 = vdwg.mxu0
        %v609 = vld [vmem:[%s5] sm:$0x1]
        %v611 = vlaneseq
        %v612 = vshrl.u32 %v611, 7
        %v613 = vsub.s32 0, %v612
        %v614 = vrot.slane %v609, %v613
        %v616 = vmul.f32 %v595, %v614
        %v617 = vmul.f32 %v598, %v614
        %v618 = vmul.f32 %v603, %v614
        %v619 = vmul.f32 %v606, %v614
        %v620 = vld [vmem:[%s6] sm:$0x1]
        %v622 = vlaneseq
        %v623 = vshrl.u32 %v622, 7
        %v624 = vsub.s32 0, %v623
        %v625 = vrot.slane %v620, %v624
        %v627 = vadd.f32 %v616, %v625
        %v628 = vadd.f32 %v617, %v625
        %v629 = vadd.f32 %v618, %v625
        %v630 = vadd.f32 %v619, %v625
        %vm631 = vcmp.ge.f32.partialorder %v627, 0.0
        %vm632 = vcmp.ge.f32.partialorder %v628, 0.0
        %vm633 = vcmp.ge.f32.partialorder %v629, 0.0
        %vm634 = vcmp.ge.f32.partialorder %v630, 0.0
        %v635 = vmul.f32 %v485, %v627
        %v636 = vmul.f32 %v485, %v628
        %v637 = vmul.f32 %v485, %v629
        %v638 = vmul.f32 %v485, %v630
        %v639 = vsel %vm631, %v627, %v635
        %v640 = vsel %vm632, %v628, %v636
        %v641 = vsel %vm633, %v629, %v637
        %v642 = vsel %vm634, %v630, %v638
        %v643 = vpack.c.bf16 %v640, %v639
        %v644 = vpack.c.bf16 %v642, %v641
        %v645 = vld [vmem:[#allocation3] sm:$0xf]
        %v646 = vld [vmem:[#allocation3 + $0x4] sm:$0xf]
        %v647 = vld [vmem:[#allocation3 + $0x8] sm:$0xf]
        %v648 = vld [vmem:[#allocation3 + $0xc] sm:$0xf]
        %v649 = vld [vmem:[#allocation3 + $0x10] sm:$0xf]
        %v650 = vld [vmem:[#allocation3 + $0x14] sm:$0xf]
        %v651 = vld [vmem:[#allocation3 + $0x18] sm:$0xf]
        %v652 = vld [vmem:[#allocation3 + $0x1c] sm:$0xf]
        %v653 = vld [vmem:[#allocation3 + $0x20] sm:$0xf]
        %v654 = vld [vmem:[#allocation3 + $0x24] sm:$0xf]
        %v655 = vld [vmem:[#allocation3 + $0x28] sm:$0xf]
        %v656 = vld [vmem:[#allocation3 + $0x2c] sm:$0xf]
        %v657 = vld [vmem:[#allocation3 + $0x30] sm:$0xf]
        %v658 = vld [vmem:[#allocation3 + $0x34] sm:$0xf]
        %v659 = vld [vmem:[#allocation3 + $0x38] sm:$0xf]
        %v660 = vld [vmem:[#allocation3 + $0x3c] sm:$0xf]
        %v661 = vld [vmem:[%s8] sm:$0x1]
        %v663 = vlaneseq
        %v664 = vshrl.u32 %v663, 7
        %v665 = vsub.s32 0, %v664
        %v666 = vrot.slane %v661, %v665
        %v684 = vunpack.c.l.b16 %v645
        %v685 = vunpack.c.l.b16 %v646
        %v686 = vunpack.c.l.b16 %v647
        %v687 = vunpack.c.l.b16 %v648
        %v688 = vunpack.c.l.b16 %v649
        %v689 = vunpack.c.l.b16 %v650
        %v690 = vunpack.c.l.b16 %v651
        %v691 = vunpack.c.l.b16 %v652
        %v692 = vunpack.c.l.b16 %v653
        %v693 = vunpack.c.l.b16 %v654
        %v694 = vunpack.c.l.b16 %v655
        %v695 = vunpack.c.l.b16 %v656
        %v696 = vunpack.c.l.b16 %v657
        %v697 = vunpack.c.l.b16 %v658
        %v698 = vunpack.c.l.b16 %v659
        %v699 = vunpack.c.l.b16 %v660
        %v700 = vpack.c.b16 %v685, %v684
        %v701 = vpack.c.b16 %v687, %v686
        %v702 = vpack.c.b16 %v689, %v688
        %v703 = vpack.c.b16 %v691, %v690
        %v704 = vpack.c.b16 %v693, %v692
        %v705 = vpack.c.b16 %v695, %v694
        %v706 = vpack.c.b16 %v697, %v696
        %v707 = vpack.c.b16 %v699, %v698
        %716 = vmatprep.subr.bf16.mxu0 0
        %717 = vmatpush1.bf16.msra.mxu0 %v700
        %718 = vmatprep.subr.bf16.mxu0 0
        %719 = vmatpush1.bf16.msra.mxu0 %v701
        %720 = vmatprep.subr.bf16.mxu0 0
        %721 = vmatpush1.bf16.msra.mxu0 %v702
        %722 = vmatprep.subr.bf16.mxu0 0
        %723 = vmatpush1.bf16.msra.mxu0 %v703
        %724 = vmatprep.subr.bf16.mxu0 0
        %725 = vmatpush1.bf16.msra.mxu0 %v704
        %726 = vmatprep.subr.bf16.mxu0 0
        %727 = vmatpush1.bf16.msra.mxu0 %v705
        %728 = vmatprep.subr.bf16.mxu0 0
        %729 = vmatpush1.bf16.msra.mxu0 %v706
        %730 = vmatprep.subr.bf16.mxu0 0
        %731 = vmatpush1.bf16.msra.mxu0 %v707
        %732 = vmatprep.subr.bf16.mxu0 0
        %733 = vmatpush1.bf16.msra.mxu0 0
        %734 = vmatprep.subr.bf16.mxu0 0
        %735 = vmatpush1.bf16.msra.mxu0 0
        %736 = vmatprep.subr.bf16.mxu0 0
        %737 = vmatpush1.bf16.msra.mxu0 0
        %738 = vmatprep.subr.bf16.mxu0 0
        %739 = vmatpush1.bf16.msra.mxu0 0
        %740 = vmatprep.subr.bf16.mxu0 0
        %741 = vmatpush1.bf16.msra.mxu0 0
        %742 = vmatprep.subr.bf16.mxu0 0
        %743 = vmatpush1.bf16.msra.mxu0 0
        %744 = vmatprep.subr.bf16.mxu0 0
        %745 = vmatpush1.bf16.msra.mxu0 0
        %746 = vmatprep.subr.bf16.mxu0 0
        %747 = vmatpush1.bf16.msra.mxu0 0
        %748 = vmatprep.mubr.bf16.mxu0 0
        %749 = vmatmul.mubr.bf16.gmra.mrb[0].mxu0 %v643
        %v750 = vpop.f32.mrb[0].mxu0
        %v751 = vadd.f32 %v666, %v750
        %v752 = vpop.f32.mrb[0].mxu0
        %v753 = vpop.f32.mrb[0].mxu0
        %v754 = vadd.f32 %v666, %v753
        %v755 = vpop.f32.mrb[0].mxu0
        %756 = vmatprep.mubr.bf16.mxu0 0
        %757 = vmatmul.mubr.bf16.gmra.mrb[0].mxu0 %v644
        %v758 = vpop.f32.mrb[0].mxu0
        %v759 = vadd.f32 %v666, %v758
        %v760 = vpop.f32.mrb[0].mxu0
        %v761 = vpop.f32.mrb[0].mxu0
        %v762 = vadd.f32 %v666, %v761
        %v763 = vpop.f32.mrb[0].mxu0
        %764 = vdwg.mxu0
        %765 = vst [vmem:[%s377] sm:$0xff] %v751
        %766 = vst [vmem:[%s377 + $0x8] sm:$0xff] %v754
        %767 = vst [vmem:[%s377 + $0x10] sm:$0xff] %v759
        %768 = vst [vmem:[%s377 + $0x18] sm:$0xff] %v762
        %s769 = smul.u32 4, %s23
        %p770 = scmp.lt.s32.totalorder %s769, 7
        %s771 = scalar_select %p770, %s769, 7
        %s772 = smul.addr %s771, 8
        %s773 = scalar_lea.vmem %s10, %s772
        // Predicated region
        $region65: #{feedforward_net_forward.1} parent=59 // pred_check
          %p774 = pneg %p256
        $region66: #{feedforward_net_forward.1} parent=59 // pred_check_branch
          %776 = sbr.rel (%p774) target = $region68
        $region67: #{feedforward_net_forward.1} parent=59 // pred_region
          %s777 = smul.u32 4, %s23
        $region68: #{feedforward_net_forward.1} parent=59 // pred_fallthru
          _
      $region60: #{feedforward_net_forward.1} parent=5 // pred_fallthru
        _
      %p778 = scmp.le.s32.totalorder 2, %s18
      // Predicated region
      $region69: #{feedforward_net_forward.1} parent=5 // pred_check
        %p779 = pneg %p778
      $region70: #{feedforward_net_forward.1} parent=5 // pred_check_branch
        %781 = sbr.rel (%p779) target = $region72
      $region71: #{feedforward_net_forward.1} parent=5 // pred_region
        %s782 = ssub.s32 %s18, 2
        // Predicated region
        $region73: #{feedforward_net_forward.1} parent=71 // pred_check
          %p783 = pneg %p262
        $region74: #{feedforward_net_forward.1} parent=71 // pred_check_branch
          %785 = sbr.rel (%p783) target = $region76
        $region75: #{feedforward_net_forward.1} parent=71 // pred_region
          %s786 = smul.u32 4, %s24
          %p787 = scmp.lt.s32.totalorder %s786, 7
          %s788 = scalar_select %p787, %s786, 7
          %s789 = smul.addr %s788, 8
          %s790 = scalar_lea.vmem %s10, %s789
        $region76: #{feedforward_net_forward.1} parent=71 // pred_fallthru
          _
      $region72: #{feedforward_net_forward.1} parent=5 // pred_fallthru
        _
    $region6: #{feedforward_net_forward.1} parent=1 // loop_footer
      %s22 = sadd.s32 1, %s18
    $region7: #{feedforward_net_forward.1} parent=1 // loop_footer_branch
      %17 = sbr.rel target = $region3
    $region8: #{feedforward_net_forward.1} parent=1 // loop_exit
      _
    %791 = vsyncpa [#allocation4], 1
    %s792 = scalar_lea.sflag [#allocation4], 1
    %793 = vsyncpa %s792, 1

</llo_original>
